<compile_context>
chip_gen: v7x
topology: tpu7x:2x2x1
jax: 0.10.0
libtpu: 0.0.40
codegen_flags: <defaults>
</compile_context>

<pallas_src>
import functools

import numpy as np
import jax
import jax.numpy as jnp
from jax.experimental import pallas as pl
from jax.experimental.pallas import tpu as pltpu

_LANE = 128
_SUBLANE = 8


def _round_up(n, m):
    return ((n + m - 1) // m) * m


def qnet_kernel(x_ref, w1_ref, b1_ref, w2_ref, b2_ref, w3_ref, b3_ref, out_ref):
    """One batch tile: (Linear -> ReLU) x2 -> Linear.  MXU matmuls, f32 accumulation."""
    x = x_ref[...]                      # already the dtype we feed the MXU
    # Hoist bias loads (single read/broadcast per tile).
    b1 = b1_ref[...]
    b2 = b2_ref[...]
    b3 = b3_ref[...]

    wdt = w1_ref.dtype                  # static at trace time

    h1 = jnp.dot(x, w1_ref[...], preferred_element_type=jnp.float32) + b1
    h1 = jnp.maximum(h1, 0.0)           # elementwise stays f32 (v5e has no bf16 VPU path)

    h1_in = h1.astype(wdt) if wdt != jnp.float32 else h1
    h2 = jnp.dot(h1_in, w2_ref[...], preferred_element_type=jnp.float32) + b2
    h2 = jnp.maximum(h2, 0.0)

    h2_in = h2.astype(wdt) if wdt != jnp.float32 else h2
    out = jnp.dot(h2_in, w3_ref[...], preferred_element_type=jnp.float32) + b3
    out_ref[...] = out.astype(out_ref.dtype)


def qnet_forward(x, params, *, weight_dtype=jnp.float32, tile_b=None):
    """x: [B, state_size] float32. params: dict of w1,b1,w2,b2,w3,b3 (w* in [in,out] layout).

    Pads batch to a TILE_B multiple and all feature dims to multiples of 128 (lane-dense),
    runs a batch-parallel grid with whole weights resident in VMEM, then slices padding off.
    """
    w1, b1, w2, b2, w3, b3 = (params[k] for k in ("w1", "b1", "w2", "b2", "w3", "b3"))
    B, state_size = x.shape
    num_nodes = w1.shape[1]
    action_size = w3.shape[1]

    # Lane-dense padded dims.  Zero-padded rows/cols contribute exactly nothing, so the
    # result in the un-padded window is bit-identical in f32.
    k1 = _round_up(state_size, _LANE)
    n1 = _round_up(num_nodes, _LANE)
    n3 = _round_up(action_size, _LANE)

    if tile_b is None:
        # Small problems: round B up to the sublane multiple. Large problems: 256-row batch
        # tiles fill the MXU M dim and amortize the ~0.35us per-grid-step overhead.
        tile_b = min(_round_up(B, _SUBLANE), 256)
    b_pad = _round_up(B, tile_b)

    def pad2(a, rows, cols, dtype):
        a = a.astype(dtype)
        return jnp.pad(a, ((0, rows - a.shape[0]), (0, cols - a.shape[1])))

    w_itemsize = np.dtype(weight_dtype).itemsize
    x_dtype = weight_dtype if w_itemsize < 4 else x.dtype   # bf16 x halves activation DMA

    xp = pad2(x, b_pad, k1, x_dtype)
    w1p = pad2(w1, k1, n1, weight_dtype)
    w2p = pad2(w2, n1, n1, weight_dtype)
    w3p = pad2(w3, n1, n3, weight_dtype)
    b1p = pad2(b1, 1, n1, jnp.float32)
    b2p = pad2(b2, 1, n1, jnp.float32)
    b3p = pad2(b3, 1, n3, jnp.float32)

    grid = (b_pad // tile_b,)

    def resident(shape):  # weights/biases: same block every grid step -> stays in VMEM
        return pl.BlockSpec(shape, lambda i: (0, 0))

    in_specs = [
        pl.BlockSpec((tile_b, k1), lambda i: (i, 0)),   # x tile, pipelined along batch
        resident((k1, n1)), resident((1, n1)),          # w1, b1
        resident((n1, n1)), resident((1, n1)),          # w2, b2
        resident((n1, n3)), resident((1, n3)),          # w3, b3
    ]
    out_specs = pl.BlockSpec((tile_b, n3), lambda i: (i, 0))

    # Rough VMEM budget: resident (double-buffered) weights/biases + double-buffered
    # x/out tiles + f32 intermediates.  Only raise the scoped limit when actually needed.
    est = 2 * ((k1 * n1 + n1 * n1 + n1 * n3) * w_itemsize + (2 * n1 + n3) * 4)
    est += 2 * tile_b * (k1 * np.dtype(x_dtype).itemsize + n3 * 4)
    est += 4 * tile_b * n1 * 4
    cp_kwargs = dict(dimension_semantics=("parallel",))
    if est > 24 * 1024 * 1024:
        cp_kwargs["vmem_limit_bytes"] = int(min(2 * est, 64 * 1024 * 1024))
    # TODO(synk): for num_nodes large enough that w2 (n1*n1*itemsize) no longer fits v7x's
    # 64 MiB VMEM, add a K/N-tiled grid axis instead of the whole-weights-resident fast path.

    out_padded = pl.pallas_call(
        qnet_kernel,
        out_shape=jax.ShapeDtypeStruct((b_pad, n3), jnp.float32),
        grid=grid,
        in_specs=in_specs,
        out_specs=out_specs,
        compiler_params=pltpu.CompilerParams(**cp_kwargs),
    )(xp, w1p, b1p, w2p, b2p, w3p, b3p)

    return out_padded[:B, :action_size]


def init_qnet_params(key, state_size, action_size, num_nodes):
    """Deterministic init mirroring PyTorch nn.Linear default: U(-1/sqrt(fan_in), 1/sqrt(fan_in))."""
    ks = jax.random.split(key, 6)

    def linear(kw, kb, fan_in, fan_out):
        bound = 1.0 / jnp.sqrt(jnp.float32(fan_in))
        w = jax.random.uniform(kw, (fan_in, fan_out), jnp.float32, -bound, bound)
        b = jax.random.uniform(kb, (1, fan_out), jnp.float32, -bound, bound)
        return w, b

    w1, b1 = linear(ks[0], ks[1], state_size, num_nodes)
    w2, b2 = linear(ks[2], ks[3], num_nodes, num_nodes)
    w3, b3 = linear(ks[4], ks[5], num_nodes, action_size)
    return {"w1": w1, "b1": b1, "w2": w2, "b2": b2, "w3": w3, "b3": b3}


def qnet_reference(x, p):
    """Pure-JAX reference matching the PyTorch forward."""
    h1 = jnp.maximum(x @ p["w1"] + p["b1"], 0.0)
    h2 = jnp.maximum(h1 @ p["w2"] + p["b2"], 0.0)
    return h2 @ p["w3"] + p["b3"]


if __name__ == "__main__":
    state_size, action_size, num_nodes = 16, 4, 32
    batch = 8

    key = jax.random.PRNGKey(0)
    k_params, k_x = jax.random.split(key)
    params = init_qnet_params(k_params, state_size, action_size, num_nodes)
    x = jax.random.normal(k_x, (batch, state_size), jnp.float32)

    # jit the wrappers so the padding / slicing fuses around the pallas_call instead of
    # running as separate eager XLA ops.
    fwd_f32 = jax.jit(functools.partial(qnet_forward, weight_dtype=jnp.float32))
    fwd_bf16 = jax.jit(functools.partial(qnet_forward, weight_dtype=jnp.bfloat16))

    # f32 path: exact vs reference.
    out = jax.block_until_ready(fwd_f32(x, params))
    ref = qnet_reference(x, params)
    assert out.shape == (batch, action_size)
    assert jnp.allclose(out, ref, atol=1e-5, rtol=1e-5), "f32 kernel mismatch vs reference"

    # bf16-weight fast path (half DMA/VMEM, bf16 MXU rate, f32 accumulation).
    out_bf16 = jax.block_until_ready(fwd_bf16(x, params))
    assert out_bf16.shape == (batch, action_size)
    assert float(jnp.max(jnp.abs(out_bf16 - ref))) < 5e-2, "bf16 kernel too far from reference"

    print("KERNEL_OK")
</pallas_src>

<mosaic_0001>
module attributes {stable_mosaic.version = 11 : i64} {
  func.func @qnet_kernel(%arg0: i32, %arg1: memref<8x128xf32, #tpu.memory_space<vmem>>, %arg2: memref<128x128xf32, #tpu.memory_space<vmem>>, %arg3: memref<1x128xf32, #tpu.memory_space<vmem>>, %arg4: memref<128x128xf32, #tpu.memory_space<vmem>>, %arg5: memref<1x128xf32, #tpu.memory_space<vmem>>, %arg6: memref<128x128xf32, #tpu.memory_space<vmem>>, %arg7: memref<1x128xf32, #tpu.memory_space<vmem>>, %arg8: memref<8x128xf32, #tpu.memory_space<vmem>>) attributes {dimension_semantics = [#tpu.dimension_semantics<parallel>], iteration_bounds = array<i64: 1>, scalar_prefetch = 0 : i64, scratch_operands = 0 : i64, tpu.core_type = #tpu.core_type<tc>, window_params = [{transform_indices = @transform_0, window_bounds = array<i64: 8, 128>}, {pipeline_mode = #tpu.pipeline_mode<synchronous>, transform_indices = @transform_1, window_bounds = array<i64: 128, 128>}, {pipeline_mode = #tpu.pipeline_mode<synchronous>, transform_indices = @transform_2, window_bounds = array<i64: 1, 128>}, {pipeline_mode = #tpu.pipeline_mode<synchronous>, transform_indices = @transform_3, window_bounds = array<i64: 128, 128>}, {pipeline_mode = #tpu.pipeline_mode<synchronous>, transform_indices = @transform_4, window_bounds = array<i64: 1, 128>}, {pipeline_mode = #tpu.pipeline_mode<synchronous>, transform_indices = @transform_5, window_bounds = array<i64: 128, 128>}, {pipeline_mode = #tpu.pipeline_mode<synchronous>, transform_indices = @transform_6, window_bounds = array<i64: 1, 128>}, {transform_indices = @transform_7, window_bounds = array<i64: 8, 128>}]} {
    %c0 = arith.constant 0 : index
    %c0_0 = arith.constant 0 : index
    %0 = vector.load %arg1[%c0, %c0_0] : memref<8x128xf32, #tpu.memory_space<vmem>>, vector<8x128xf32>
    %c0_1 = arith.constant 0 : index
    %c0_2 = arith.constant 0 : index
    %1 = vector.load %arg3[%c0_1, %c0_2] : memref<1x128xf32, #tpu.memory_space<vmem>>, vector<1x128xf32>
    %c0_3 = arith.constant 0 : index
    %c0_4 = arith.constant 0 : index
    %2 = vector.load %arg5[%c0_3, %c0_4] : memref<1x128xf32, #tpu.memory_space<vmem>>, vector<1x128xf32>
    %c0_5 = arith.constant 0 : index
    %c0_6 = arith.constant 0 : index
    %3 = vector.load %arg7[%c0_5, %c0_6] : memref<1x128xf32, #tpu.memory_space<vmem>>, vector<1x128xf32>
    %c0_7 = arith.constant 0 : index
    %c0_8 = arith.constant 0 : index
    %4 = vector.load %arg2[%c0_7, %c0_8] : memref<128x128xf32, #tpu.memory_space<vmem>>, vector<128x128xf32>
    %cst = arith.constant dense<0.000000e+00> : vector<8x128xf32>
    %5 = tpu.matmul %0, %4, %cst {dimension_numbers = #tpu.dot_dimension_numbers<[1], [0], [0], [1], [0, 0, 1, 1], [], []>} : vector<8x128xf32>, vector<128x128xf32>, vector<8x128xf32> -> vector<8x128xf32>
    %6 = vector.broadcast %1 : vector<1x128xf32> to vector<8x128xf32>
    %7 = arith.addf %5, %6 : vector<8x128xf32>
    %cst_9 = arith.constant 0.000000e+00 : f32
    %8 = vector.broadcast %cst_9 : f32 to vector<8x128xf32>
    %9 = arith.maximumf %7, %8 : vector<8x128xf32>
    %c0_10 = arith.constant 0 : index
    %c0_11 = arith.constant 0 : index
    %10 = vector.load %arg4[%c0_10, %c0_11] : memref<128x128xf32, #tpu.memory_space<vmem>>, vector<128x128xf32>
    %cst_12 = arith.constant dense<0.000000e+00> : vector<8x128xf32>
    %11 = tpu.matmul %9, %10, %cst_12 {dimension_numbers = #tpu.dot_dimension_numbers<[1], [0], [0], [1], [0, 0, 1, 1], [], []>} : vector<8x128xf32>, vector<128x128xf32>, vector<8x128xf32> -> vector<8x128xf32>
    %12 = vector.broadcast %2 : vector<1x128xf32> to vector<8x128xf32>
    %13 = arith.addf %11, %12 : vector<8x128xf32>
    %cst_13 = arith.constant 0.000000e+00 : f32
    %14 = vector.broadcast %cst_13 : f32 to vector<8x128xf32>
    %15 = arith.maximumf %13, %14 : vector<8x128xf32>
    %c0_14 = arith.constant 0 : index
    %c0_15 = arith.constant 0 : index
    %16 = vector.load %arg6[%c0_14, %c0_15] : memref<128x128xf32, #tpu.memory_space<vmem>>, vector<128x128xf32>
    %cst_16 = arith.constant dense<0.000000e+00> : vector<8x128xf32>
    %17 = tpu.matmul %15, %16, %cst_16 {dimension_numbers = #tpu.dot_dimension_numbers<[1], [0], [0], [1], [0, 0, 1, 1], [], []>} : vector<8x128xf32>, vector<128x128xf32>, vector<8x128xf32> -> vector<8x128xf32>
    %18 = vector.broadcast %3 : vector<1x128xf32> to vector<8x128xf32>
    %19 = arith.addf %17, %18 : vector<8x128xf32>
    %c0_17 = arith.constant 0 : index
    %c0_18 = arith.constant 0 : index
    %20 = vector.load %arg8[%c0_17, %c0_18] : memref<8x128xf32, #tpu.memory_space<vmem>>, vector<8x128xf32>
    tpu.vector_store %arg8[%c0_17, %c0_18], %19 {strides = array<i32>} : memref<8x128xf32, #tpu.memory_space<vmem>>, vector<8x128xf32>,
    return
  }
  func.func @transform_0(%arg0: i32) -> (i32, i32) {
    %c0_i32 = arith.constant 0 : i32
    %c0_i32_0 = arith.constant 0 : i32
    return %arg0, %c0_i32 : i32, i32
  }
  func.func @transform_1(%arg0: i32) -> (i32, i32) {
    %c0_i32 = arith.constant 0 : i32
    %c0_i32_0 = arith.constant 0 : i32
    %c0_i32_1 = arith.constant 0 : i32
    return %c0_i32, %c0_i32_0 : i32, i32
  }
  func.func @transform_2(%arg0: i32) -> (i32, i32) {
    %c0_i32 = arith.constant 0 : i32
    %c0_i32_0 = arith.constant 0 : i32
    %c0_i32_1 = arith.constant 0 : i32
    return %c0_i32, %c0_i32_0 : i32, i32
  }
  func.func @transform_3(%arg0: i32) -> (i32, i32) {
    %c0_i32 = arith.constant 0 : i32
    %c0_i32_0 = arith.constant 0 : i32
    %c0_i32_1 = arith.constant 0 : i32
    return %c0_i32, %c0_i32_0 : i32, i32
  }
  func.func @transform_4(%arg0: i32) -> (i32, i32) {
    %c0_i32 = arith.constant 0 : i32
    %c0_i32_0 = arith.constant 0 : i32
    %c0_i32_1 = arith.constant 0 : i32
    return %c0_i32, %c0_i32_0 : i32, i32
  }
  func.func @transform_5(%arg0: i32) -> (i32, i32) {
    %c0_i32 = arith.constant 0 : i32
    %c0_i32_0 = arith.constant 0 : i32
    %c0_i32_1 = arith.constant 0 : i32
    return %c0_i32, %c0_i32_0 : i32, i32
  }
  func.func @transform_6(%arg0: i32) -> (i32, i32) {
    %c0_i32 = arith.constant 0 : i32
    %c0_i32_0 = arith.constant 0 : i32
    %c0_i32_1 = arith.constant 0 : i32
    return %c0_i32, %c0_i32_0 : i32, i32
  }
  func.func @transform_7(%arg0: i32) -> (i32, i32) {
    %c0_i32 = arith.constant 0 : i32
    %c0_i32_0 = arith.constant 0 : i32
    return %arg0, %c0_i32 : i32, i32
  }
}

</mosaic_0001>

<llo_original>
// kernel: qnet_forward.1
$region0: #{qnet_forward.1}
  #allocation0 [shape = 'u32[]', space=smem, size = 0x4, offset = 0x4, fixed_abs, tag = 'smem constant byte address 0x4 - core index']
  #allocation1 [shape = 'u32[144,128]{1,0:T(1,128)}', space=vmem, size = 0x12000, scoped, tag = 'internal scratch']
  %s0 = inlined_call_operand.vmem [shape: f32[8,128], index: 0, kind: input, shape index: {}]
  %s1 = inlined_call_operand.vmem [shape: f32[128,128], index: 1, kind: input, shape index: {}]
  %s2 = inlined_call_operand.vmem [shape: f32[1,128], index: 2, kind: input, shape index: {}]
  %s3 = inlined_call_operand.vmem [shape: f32[128,128], index: 3, kind: input, shape index: {}]
  %s4 = inlined_call_operand.vmem [shape: f32[1,128], index: 4, kind: input, shape index: {}]
  %s5 = inlined_call_operand.vmem [shape: f32[128,128], index: 5, kind: input, shape index: {}]
  %s6 = inlined_call_operand.vmem [shape: f32[1,128], index: 6, kind: input, shape index: {}]
  %s7 = inlined_call_operand.vmem [shape: f32[8,128], index: 7, kind: output, shape index: {}]
  %s8 = sld [smem:[#allocation0]]
  $region38: #{qnet_forward.1} parent=0
    _
  %s10 = ssub.s32 1, %s8
  %s11 = scalar_select 0, %s10, %s8
  // Predicated region
  $region2: #{qnet_forward.1} parent=0 // pred_check
    _
  $region3: #{qnet_forward.1} parent=0 // pred_check_branch
    %13 = sbr.rel (0) target = $region5
  $region4: #{qnet_forward.1} parent=0 // pred_region
    _
  $region5: #{qnet_forward.1} parent=0 // pred_fallthru
    _
  // Predicated region
  $region6: #{qnet_forward.1} parent=0 // pred_check
    _
  $region7: #{qnet_forward.1} parent=0 // pred_check_branch
    %15 = sbr.rel (0) target = $region9
  $region8: #{qnet_forward.1} parent=0 // pred_region
    _
  $region9: #{qnet_forward.1} parent=0 // pred_fallthru
    _
  // Predicated region
  $region10: #{qnet_forward.1} parent=0 // pred_check
    _
  $region11: #{qnet_forward.1} parent=0 // pred_check_branch
    %17 = sbr.rel (0) target = $region13
  $region12: #{qnet_forward.1} parent=0 // pred_region
    _
  $region13: #{qnet_forward.1} parent=0 // pred_fallthru
    _
  // Predicated region
  $region14: #{qnet_forward.1} parent=0 // pred_check
    _
  $region15: #{qnet_forward.1} parent=0 // pred_check_branch
    %19 = sbr.rel (0) target = $region17
  $region16: #{qnet_forward.1} parent=0 // pred_region
    _
  $region17: #{qnet_forward.1} parent=0 // pred_fallthru
    _
  // Predicated region
  $region18: #{qnet_forward.1} parent=0 // pred_check
    _
  $region19: #{qnet_forward.1} parent=0 // pred_check_branch
    %21 = sbr.rel (0) target = $region21
  $region20: #{qnet_forward.1} parent=0 // pred_region
    _
  $region21: #{qnet_forward.1} parent=0 // pred_fallthru
    _
  // Predicated region
  $region22: #{qnet_forward.1} parent=0 // pred_check
    _
  $region23: #{qnet_forward.1} parent=0 // pred_check_branch
    %23 = sbr.rel (0) target = $region25
  $region24: #{qnet_forward.1} parent=0 // pred_region
    _
  $region25: #{qnet_forward.1} parent=0 // pred_fallthru
    _
  // Predicated region
  $region26: #{qnet_forward.1} parent=0 // pred_check
    _
  $region27: #{qnet_forward.1} parent=0 // pred_check_branch
    %25 = sbr.rel (0) target = $region29
  $region28: #{qnet_forward.1} parent=0 // pred_region
    _
  $region29: #{qnet_forward.1} parent=0 // pred_fallthru
    _
  %v26 = vld [vmem:[%s0] sm:$0xff]
  %v27 = vld [vmem:[%s2] sm:$0x1]
  %v28 = vld [vmem:[%s4] sm:$0x1]
  %v29 = vld [vmem:[%s6] sm:$0x1]
  %v30 = vld [vmem:[%s1] sm:$0xff]
  %v31 = vld [vmem:[%s1 + $0x8] sm:$0xff]
  %v32 = vld [vmem:[%s1 + $0x10] sm:$0xff]
  %v33 = vld [vmem:[%s1 + $0x18] sm:$0xff]
  %v34 = vld [vmem:[%s1 + $0x20] sm:$0xff]
  %v35 = vld [vmem:[%s1 + $0x28] sm:$0xff]
  %v36 = vld [vmem:[%s1 + $0x30] sm:$0xff]
  %v37 = vld [vmem:[%s1 + $0x38] sm:$0xff]
  %v38 = vld [vmem:[%s1 + $0x40] sm:$0xff]
  %v39 = vld [vmem:[%s1 + $0x48] sm:$0xff]
  %v40 = vld [vmem:[%s1 + $0x50] sm:$0xff]
  %v41 = vld [vmem:[%s1 + $0x58] sm:$0xff]
  %v42 = vld [vmem:[%s1 + $0x60] sm:$0xff]
  %v43 = vld [vmem:[%s1 + $0x68] sm:$0xff]
  %v44 = vld [vmem:[%s1 + $0x70] sm:$0xff]
  %v45 = vld [vmem:[%s1 + $0x78] sm:$0xff]
  %v47 = vlaneseq
  %v48 = vshrl.u32 %v47, 7
  %v49 = vsub.s32 0, %v48
  %v50 = vrot.slane %v27, %v49
  %52 = vmatprep.subr.mxu0 0.0
  %53 = vmatpush1.msra.mxu0 %v30
  %54 = vmatprep.subr.mxu0 0.0
  %55 = vmatpush1.msra.mxu0 %v31
  %56 = vmatprep.subr.mxu0 0.0
  %57 = vmatpush1.msra.mxu0 %v32
  %58 = vmatprep.subr.mxu0 0.0
  %59 = vmatpush1.msra.mxu0 %v33
  %60 = vmatprep.subr.mxu0 0.0
  %61 = vmatpush1.msra.mxu0 %v34
  %62 = vmatprep.subr.mxu0 0.0
  %63 = vmatpush1.msra.mxu0 %v35
  %64 = vmatprep.subr.mxu0 0.0
  %65 = vmatpush1.msra.mxu0 %v36
  %66 = vmatprep.subr.mxu0 0.0
  %67 = vmatpush1.msra.mxu0 %v37
  %68 = vmatprep.subr.mxu0 0.0
  %69 = vmatpush1.msra.mxu0 %v38
  %70 = vmatprep.subr.mxu0 0.0
  %71 = vmatpush1.msra.mxu0 %v39
  %72 = vmatprep.subr.mxu0 0.0
  %73 = vmatpush1.msra.mxu0 %v40
  %74 = vmatprep.subr.mxu0 0.0
  %75 = vmatpush1.msra.mxu0 %v41
  %76 = vmatprep.subr.mxu0 0.0
  %77 = vmatpush1.msra.mxu0 %v42
  %78 = vmatprep.subr.mxu0 0.0
  %79 = vmatpush1.msra.mxu0 %v43
  %80 = vmatprep.subr.mxu0 0.0
  %81 = vmatpush1.msra.mxu0 %v44
  %82 = vmatprep.subr.mxu0 0.0
  %83 = vmatpush1.msra.mxu0 %v45
  %84 = vmatprep.subr.mxu0 0.0
  %85 = vmatpush1.msra.mxu0 0.0
  %86 = vmatprep.subr.mxu0 0.0
  %87 = vmatpush1.msra.mxu0 0.0
  %88 = vmatprep.subr.mxu0 0.0
  %89 = vmatpush1.msra.mxu0 0.0
  %90 = vmatprep.subr.mxu0 0.0
  %91 = vmatpush1.msra.mxu0 0.0
  %92 = vmatprep.subr.mxu0 0.0
  %93 = vmatpush1.msra.mxu0 0.0
  %94 = vmatprep.subr.mxu0 0.0
  %95 = vmatpush1.msra.mxu0 0.0
  %96 = vmatprep.subr.mxu0 0.0
  %97 = vmatpush1.msra.mxu0 0.0
  %98 = vmatprep.subr.mxu0 0.0
  %99 = vmatpush1.msra.mxu0 0.0
  %100 = vmatprep.subr.mxu0 0.0
  %101 = vmatpush1.msra.mxu0 0.0
  %102 = vmatprep.subr.mxu0 0.0
  %103 = vmatpush1.msra.mxu0 0.0
  %104 = vmatprep.subr.mxu0 0.0
  %105 = vmatpush1.msra.mxu0 0.0
  %106 = vmatprep.subr.mxu0 0.0
  %107 = vmatpush1.msra.mxu0 0.0
  %108 = vmatprep.subr.mxu0 0.0
  %109 = vmatpush1.msra.mxu0 0.0
  %110 = vmatprep.subr.mxu0 0.0
  %111 = vmatpush1.msra.mxu0 0.0
  %112 = vmatprep.subr.mxu0 0.0
  %113 = vmatpush1.msra.mxu0 0.0
  %114 = vmatprep.subr.mxu0 0.0
  %115 = vmatpush1.msra.mxu0 0.0
  %116 = vmatprep.mubr.f32.mxu0 0.0
  %117 = vmatmul.mubr.f32.gmra.mrb[0].mxu0 %v26
  %v118 = vpop.f32.mrb[0].mxu0
  %v119 = vadd.f32 %v50, %v118
  %v120 = vpop.f32.mrb[0].mxu0
  %121 = vdwg.mxu0
  %v122 = vmax.f32 %v119, 0.0
  %v123 = vld [vmem:[%s3] sm:$0xff]
  %v124 = vld [vmem:[%s3 + $0x8] sm:$0xff]
  %v125 = vld [vmem:[%s3 + $0x10] sm:$0xff]
  %v126 = vld [vmem:[%s3 + $0x18] sm:$0xff]
  %v127 = vld [vmem:[%s3 + $0x20] sm:$0xff]
  %v128 = vld [vmem:[%s3 + $0x28] sm:$0xff]
  %v129 = vld [vmem:[%s3 + $0x30] sm:$0xff]
  %v130 = vld [vmem:[%s3 + $0x38] sm:$0xff]
  %v131 = vld [vmem:[%s3 + $0x40] sm:$0xff]
  %v132 = vld [vmem:[%s3 + $0x48] sm:$0xff]
  %v133 = vld [vmem:[%s3 + $0x50] sm:$0xff]
  %v134 = vld [vmem:[%s3 + $0x58] sm:$0xff]
  %v135 = vld [vmem:[%s3 + $0x60] sm:$0xff]
  %v136 = vld [vmem:[%s3 + $0x68] sm:$0xff]
  %v137 = vld [vmem:[%s3 + $0x70] sm:$0xff]
  %v138 = vld [vmem:[%s3 + $0x78] sm:$0xff]
  %v140 = vlaneseq
  %v141 = vshrl.u32 %v140, 7
  %v142 = vsub.s32 0, %v141
  %v143 = vrot.slane %v28, %v142
  %145 = vmatprep.subr.mxu0 0.0
  %146 = vmatpush1.msra.mxu0 %v123
  %147 = vmatprep.subr.mxu0 0.0
  %148 = vmatpush1.msra.mxu0 %v124
  %149 = vmatprep.subr.mxu0 0.0
  %150 = vmatpush1.msra.mxu0 %v125
  %151 = vmatprep.subr.mxu0 0.0
  %152 = vmatpush1.msra.mxu0 %v126
  %153 = vmatprep.subr.mxu0 0.0
  %154 = vmatpush1.msra.mxu0 %v127
  %155 = vmatprep.subr.mxu0 0.0
  %156 = vmatpush1.msra.mxu0 %v128
  %157 = vmatprep.subr.mxu0 0.0
  %158 = vmatpush1.msra.mxu0 %v129
  %159 = vmatprep.subr.mxu0 0.0
  %160 = vmatpush1.msra.mxu0 %v130
  %161 = vmatprep.subr.mxu0 0.0
  %162 = vmatpush1.msra.mxu0 %v131
  %163 = vmatprep.subr.mxu0 0.0
  %164 = vmatpush1.msra.mxu0 %v132
  %165 = vmatprep.subr.mxu0 0.0
  %166 = vmatpush1.msra.mxu0 %v133
  %167 = vmatprep.subr.mxu0 0.0
  %168 = vmatpush1.msra.mxu0 %v134
  %169 = vmatprep.subr.mxu0 0.0
  %170 = vmatpush1.msra.mxu0 %v135
  %171 = vmatprep.subr.mxu0 0.0
  %172 = vmatpush1.msra.mxu0 %v136
  %173 = vmatprep.subr.mxu0 0.0
  %174 = vmatpush1.msra.mxu0 %v137
  %175 = vmatprep.subr.mxu0 0.0
  %176 = vmatpush1.msra.mxu0 %v138
  %177 = vmatprep.subr.mxu0 0.0
  %178 = vmatpush1.msra.mxu0 0.0
  %179 = vmatprep.subr.mxu0 0.0
  %180 = vmatpush1.msra.mxu0 0.0
  %181 = vmatprep.subr.mxu0 0.0
  %182 = vmatpush1.msra.mxu0 0.0
  %183 = vmatprep.subr.mxu0 0.0
  %184 = vmatpush1.msra.mxu0 0.0
  %185 = vmatprep.subr.mxu0 0.0
  %186 = vmatpush1.msra.mxu0 0.0
  %187 = vmatprep.subr.mxu0 0.0
  %188 = vmatpush1.msra.mxu0 0.0
  %189 = vmatprep.subr.mxu0 0.0
  %190 = vmatpush1.msra.mxu0 0.0
  %191 = vmatprep.subr.mxu0 0.0
  %192 = vmatpush1.msra.mxu0 0.0
  %193 = vmatprep.subr.mxu0 0.0
  %194 = vmatpush1.msra.mxu0 0.0
  %195 = vmatprep.subr.mxu0 0.0
  %196 = vmatpush1.msra.mxu0 0.0
  %197 = vmatprep.subr.mxu0 0.0
  %198 = vmatpush1.msra.mxu0 0.0
  %199 = vmatprep.subr.mxu0 0.0
  %200 = vmatpush1.msra.mxu0 0.0
  %201 = vmatprep.subr.mxu0 0.0
  %202 = vmatpush1.msra.mxu0 0.0
  %203 = vmatprep.subr.mxu0 0.0
  %204 = vmatpush1.msra.mxu0 0.0
  %205 = vmatprep.subr.mxu0 0.0
  %206 = vmatpush1.msra.mxu0 0.0
  %207 = vmatprep.subr.mxu0 0.0
  %208 = vmatpush1.msra.mxu0 0.0
  %209 = vmatprep.mubr.f32.mxu0 0.0
  %210 = vmatmul.mubr.f32.gmra.mrb[0].mxu0 %v122
  %v211 = vpop.f32.mrb[0].mxu0
  %v212 = vadd.f32 %v143, %v211
  %v213 = vpop.f32.mrb[0].mxu0
  %214 = vdwg.mxu0
  %v215 = vmax.f32 %v212, 0.0
  %v216 = vld [vmem:[%s5] sm:$0xff]
  %v217 = vld [vmem:[%s5 + $0x8] sm:$0xff]
  %v218 = vld [vmem:[%s5 + $0x10] sm:$0xff]
  %v219 = vld [vmem:[%s5 + $0x18] sm:$0xff]
  %v220 = vld [vmem:[%s5 + $0x20] sm:$0xff]
  %v221 = vld [vmem:[%s5 + $0x28] sm:$0xff]
  %v222 = vld [vmem:[%s5 + $0x30] sm:$0xff]
  %v223 = vld [vmem:[%s5 + $0x38] sm:$0xff]
  %v224 = vld [vmem:[%s5 + $0x40] sm:$0xff]
  %v225 = vld [vmem:[%s5 + $0x48] sm:$0xff]
  %v226 = vld [vmem:[%s5 + $0x50] sm:$0xff]
  %v227 = vld [vmem:[%s5 + $0x58] sm:$0xff]
  %v228 = vld [vmem:[%s5 + $0x60] sm:$0xff]
  %v229 = vld [vmem:[%s5 + $0x68] sm:$0xff]
  %v230 = vld [vmem:[%s5 + $0x70] sm:$0xff]
  %v231 = vld [vmem:[%s5 + $0x78] sm:$0xff]
  %v233 = vlaneseq
  %v234 = vshrl.u32 %v233, 7
  %v235 = vsub.s32 0, %v234
  %v236 = vrot.slane %v29, %v235
  %238 = vmatprep.subr.mxu0 0.0
  %239 = vmatpush1.msra.mxu0 %v216
  %240 = vmatprep.subr.mxu0 0.0
  %241 = vmatpush1.msra.mxu0 %v217
  %242 = vmatprep.subr.mxu0 0.0
  %243 = vmatpush1.msra.mxu0 %v218
  %244 = vmatprep.subr.mxu0 0.0
  %245 = vmatpush1.msra.mxu0 %v219
  %246 = vmatprep.subr.mxu0 0.0
  %247 = vmatpush1.msra.mxu0 %v220
  %248 = vmatprep.subr.mxu0 0.0
  %249 = vmatpush1.msra.mxu0 %v221
  %250 = vmatprep.subr.mxu0 0.0
  %251 = vmatpush1.msra.mxu0 %v222
  %252 = vmatprep.subr.mxu0 0.0
  %253 = vmatpush1.msra.mxu0 %v223
  %254 = vmatprep.subr.mxu0 0.0
  %255 = vmatpush1.msra.mxu0 %v224
  %256 = vmatprep.subr.mxu0 0.0
  %257 = vmatpush1.msra.mxu0 %v225
  %258 = vmatprep.subr.mxu0 0.0
  %259 = vmatpush1.msra.mxu0 %v226
  %260 = vmatprep.subr.mxu0 0.0
  %261 = vmatpush1.msra.mxu0 %v227
  %262 = vmatprep.subr.mxu0 0.0
  %263 = vmatpush1.msra.mxu0 %v228
  %264 = vmatprep.subr.mxu0 0.0
  %265 = vmatpush1.msra.mxu0 %v229
  %266 = vmatprep.subr.mxu0 0.0
  %267 = vmatpush1.msra.mxu0 %v230
  %268 = vmatprep.subr.mxu0 0.0
  %269 = vmatpush1.msra.mxu0 %v231
  %270 = vmatprep.subr.mxu0 0.0
  %271 = vmatpush1.msra.mxu0 0.0
  %272 = vmatprep.subr.mxu0 0.0
  %273 = vmatpush1.msra.mxu0 0.0
  %274 = vmatprep.subr.mxu0 0.0
  %275 = vmatpush1.msra.mxu0 0.0
  %276 = vmatprep.subr.mxu0 0.0
  %277 = vmatpush1.msra.mxu0 0.0
  %278 = vmatprep.subr.mxu0 0.0
  %279 = vmatpush1.msra.mxu0 0.0
  %280 = vmatprep.subr.mxu0 0.0
  %281 = vmatpush1.msra.mxu0 0.0
  %282 = vmatprep.subr.mxu0 0.0
  %283 = vmatpush1.msra.mxu0 0.0
  %284 = vmatprep.subr.mxu0 0.0
  %285 = vmatpush1.msra.mxu0 0.0
  %286 = vmatprep.subr.mxu0 0.0
  %287 = vmatpush1.msra.mxu0 0.0
  %288 = vmatprep.subr.mxu0 0.0
  %289 = vmatpush1.msra.mxu0 0.0
  %290 = vmatprep.subr.mxu0 0.0
  %291 = vmatpush1.msra.mxu0 0.0
  %292 = vmatprep.subr.mxu0 0.0
  %293 = vmatpush1.msra.mxu0 0.0
  %294 = vmatprep.subr.mxu0 0.0
  %295 = vmatpush1.msra.mxu0 0.0
  %296 = vmatprep.subr.mxu0 0.0
  %297 = vmatpush1.msra.mxu0 0.0
  %298 = vmatprep.subr.mxu0 0.0
  %299 = vmatpush1.msra.mxu0 0.0
  %300 = vmatprep.subr.mxu0 0.0
  %301 = vmatpush1.msra.mxu0 0.0
  %302 = vmatprep.mubr.f32.mxu0 0.0
  %303 = vmatmul.mubr.f32.gmra.mrb[0].mxu0 %v215
  %v304 = vpop.f32.mrb[0].mxu0
  %v305 = vadd.f32 %v236, %v304
  %v306 = vpop.f32.mrb[0].mxu0
  %307 = vdwg.mxu0
  %308 = vst [vmem:[%s7] sm:$0xff] %v305
  // Predicated region
  $region30: #{qnet_forward.1} parent=0 // pred_check
    _
  $region31: #{qnet_forward.1} parent=0 // pred_check_branch
    %310 = sbr.rel (0) target = $region33
  $region32: #{qnet_forward.1} parent=0 // pred_region
    _
  $region33: #{qnet_forward.1} parent=0 // pred_fallthru
    _
  // Predicated region
  $region34: #{qnet_forward.1} parent=0 // pred_check
    _
  $region35: #{qnet_forward.1} parent=0 // pred_check_branch
    %312 = sbr.rel (0) target = $region37
  $region36: #{qnet_forward.1} parent=0 // pred_region
    _
  $region37: #{qnet_forward.1} parent=0 // pred_fallthru
    _

</llo_original>
